<compile_context>
chip_gen: v5e
topology: v5e:2x2
jax: 0.10.0
libtpu: 0.0.40
codegen_flags: <defaults>
</compile_context>

<pallas_src>
import jax
import jax.numpy as jnp
import numpy as np
from jax.experimental import pallas as pl
from jax.experimental.pallas import tpu as pltpu

BDIM = 4            # dimension of the 1D (monomial) basis
D3 = BDIM ** 3      # per-pixel separable-basis feature count
_LANE = 128


def separable_basis_kernel(img_ref, w_ref, out_ref, y_ref):
    # img_ref: (1, 3, T)   pixel tile; 3 color channels on sublanes, T on lanes
    # w_ref:   (1, 32, 16) per-batch weights, rows 8d..8d+2 = W_d[c, e*4+f], rest 0
    # out_ref: (1, 3, T)
    # y_ref:   (16, T)     VMEM scratch holding y[e*4+f, :] = c1^e * c2^f
    img = img_ref[0]                       # (3, T): c0, c1, c2 on sublanes 0..2
    img2 = img * img                       # dense (3, T): squares of all channels
    img3 = img2 * img                      # dense (3, T): cubes

    c1, c2 = img[1:2], img[2:3]
    c1_2, c2_2 = img2[1:2], img2[2:3]
    c1_3, c2_3 = img3[1:2], img3[2:3]

    # c2vec[f] = c2^f  (f = 0..3)
    ones = jnp.ones_like(c2)
    c2vec = jnp.concatenate([ones, c2, c2_2, c2_3], axis=0)       # (4, T)

    # Assemble y in VMEM with four 4-sublane slice stores (e = 0 block is a
    # plain copy: no ones-plane multiply).
    y_ref[0:4, :] = c2vec
    y_ref[4:8, :] = c1 * c2vec
    y_ref[8:12, :] = c1_2 * c2vec
    y_ref[12:16, :] = c1_3 * c2vec

    # One fused weight-stationary MXU matmul: (32, 16) @ (16, T) -> (32, T).
    r = jnp.dot(w_ref[0], y_ref[...], preferred_element_type=jnp.float32)

    # out[c] = sum_d c0^d * (W_d @ y)[c]; g_d slices are vreg-row aligned.
    c0, c0_2, c0_3 = img[0:1], img2[0:1], img3[0:1]
    out_ref[0] = r[0:3] + c0 * r[8:11] + c0_2 * r[16:19] + c0_3 * r[24:27]


def separable_basis(image, parameters, *, tile=32768):
    """image: (B, 3, H, W) NCHW; parameters: (B, 3*BDIM**3). Returns (B, 3, H, W) f32."""
    B, C, H, W = image.shape
    assert C == 3, "SeparableBasis operates on 3-channel images"
    HW = H * W

    # Lane-dense pixel tile: multiple of 128, no larger than the lane-padded image.
    t = min(int(tile), pl.cdiv(HW, _LANE) * _LANE)
    t = max(_LANE, (t // _LANE) * _LANE)
    grid_p = pl.cdiv(HW, t)                      # ragged tail handled by Pallas

    img_flat = image.reshape(B, 3, HW).astype(jnp.float32)   # no host-side padding

    # parameters[b, c, d*16 + e*4 + f] -> w32[b, 8*d + c, e*4 + f]  (rows 8d+3..8d+7 = 0)
    w = parameters.reshape(B, 3, BDIM, BDIM * BDIM).astype(jnp.float32)
    w = jnp.transpose(w, (0, 2, 1, 3))                        # (B, 4, 3, 16)
    w = jnp.pad(w, ((0, 0), (0, 0), (0, 8 - 3), (0, 0)))      # (B, 4, 8, 16)
    w32 = w.reshape(B, 4 * 8, BDIM * BDIM)                    # (B, 32, 16)

    bytes_accessed = 2 * B * HW * 3 * 4 + B * 32 * 16 * 4
    flops = 2 * B * HW * 3 * D3

    out = pl.pallas_call(
        separable_basis_kernel,
        out_shape=jax.ShapeDtypeStruct((B, 3, HW), jnp.float32),
        grid_spec=pltpu.PrefetchScalarGridSpec(
            num_scalar_prefetch=0,
            grid=(B, grid_p),
            in_specs=[
                pl.BlockSpec((1, 3, t), lambda b, p: (b, 0, p)),
                pl.BlockSpec((1, 32, BDIM * BDIM), lambda b, p: (b, 0, 0)),
            ],
            out_specs=pl.BlockSpec((1, 3, t), lambda b, p: (b, 0, p)),
            scratch_shapes=[pltpu.VMEM((16, t), jnp.float32)],
        ),
        compiler_params=pltpu.CompilerParams(
            dimension_semantics=("parallel", "parallel"),
            vmem_limit_bytes=48 * 1024 * 1024),
        cost_estimate=pl.CostEstimate(
            flops=flops, transcendentals=0, bytes_accessed=bytes_accessed),
    )(img_flat, w32)

    return out.reshape(B, 3, H, W)


def separable_basis_ref(image, parameters):
    """Pure-JAX reference mirroring the PyTorch einsum semantics (monomial basis)."""
    B, C, H, W = image.shape
    img = image.astype(jnp.float32)
    e = jnp.stack([img ** k for k in range(BDIM)], axis=2)            # (B,3,D,H,W)
    e1 = jnp.einsum('bdij,beij,bfij->bdefij', e[:, 0], e[:, 1], e[:, 2])
    x = e1.reshape(B, D3, H, W)
    w = parameters.reshape(B, 3, D3).astype(jnp.float32)
    return jnp.einsum('bdij,bcd->bcij', x, w)


if __name__ == "__main__":
    key = jax.random.PRNGKey(0)
    k1, k2 = jax.random.split(key)
    B, H, W = 2, 16, 16
    image = jax.random.uniform(k1, (B, 3, H, W), dtype=jnp.float32)
    parameters = jax.random.normal(k2, (B, 3 * D3), dtype=jnp.float32)

    out = separable_basis(image, parameters)
    jax.block_until_ready(out)
    ref = separable_basis_ref(image, parameters)
    np.testing.assert_allclose(np.asarray(out), np.asarray(ref), rtol=1e-5, atol=5e-5)

    # Ragged case (HW not a multiple of 128) exercises the masked-writeback path
    # that replaced the host-side pad/slice copies.
    k3, k4 = jax.random.split(k2)
    image_r = jax.random.uniform(k3, (1, 3, 17, 19), dtype=jnp.float32)
    params_r = jax.random.normal(k4, (1, 3 * D3), dtype=jnp.float32)
    out_r = separable_basis(image_r, params_r)
    jax.block_until_ready(out_r)
    ref_r = separable_basis_ref(image_r, params_r)
    np.testing.assert_allclose(np.asarray(out_r), np.asarray(ref_r), rtol=1e-5, atol=5e-5)

    print("KERNEL_OK")
</pallas_src>

<mosaic_0001>
module attributes {stable_mosaic.version = 11 : i64} {
  func.func @separable_basis_kernel(%arg0: i32, %arg1: i32, %arg2: memref<1x3x256xf32, #tpu.memory_space<vmem>>, %arg3: memref<1x32x16xf32, #tpu.memory_space<vmem>>, %arg4: memref<1x3x256xf32, #tpu.memory_space<vmem>>, %arg5: memref<16x256xf32, #tpu.memory_space<vmem>>) attributes {dimension_semantics = [#tpu.dimension_semantics<parallel>, #tpu.dimension_semantics<parallel>], iteration_bounds = array<i64: 2, 1>, scalar_prefetch = 0 : i64, scratch_operands = 1 : i64, tpu.core_type = #tpu.core_type<tc>, window_params = [{transform_indices = @transform_0, window_bounds = array<i64: 1, 3, 256>}, {transform_indices = @transform_1, window_bounds = array<i64: 1, 32, 16>}, {transform_indices = @transform_2, window_bounds = array<i64: 1, 3, 256>}]} {
    %c0 = arith.constant 0 : index
    %c0_0 = arith.constant 0 : index
    %c0_1 = arith.constant 0 : index
    %0 = vector.load %arg2[%c0, %c0_0, %c0_1] : memref<1x3x256xf32, #tpu.memory_space<vmem>>, vector<1x3x256xf32>
    %1 = vector.shape_cast %0 : vector<1x3x256xf32> to vector<3x256xf32>
    %2 = arith.mulf %1, %1 : vector<3x256xf32>
    %3 = arith.mulf %2, %1 : vector<3x256xf32>
    %4 = vector.extract_strided_slice %1 {offsets = [1, 0], sizes = [1, 256], strides = [1, 1]} : vector<3x256xf32> to vector<1x256xf32>
    %5 = vector.extract_strided_slice %1 {offsets = [2, 0], sizes = [1, 256], strides = [1, 1]} : vector<3x256xf32> to vector<1x256xf32>
    %6 = vector.extract_strided_slice %2 {offsets = [1, 0], sizes = [1, 256], strides = [1, 1]} : vector<3x256xf32> to vector<1x256xf32>
    %7 = vector.extract_strided_slice %2 {offsets = [2, 0], sizes = [1, 256], strides = [1, 1]} : vector<3x256xf32> to vector<1x256xf32>
    %8 = vector.extract_strided_slice %3 {offsets = [1, 0], sizes = [1, 256], strides = [1, 1]} : vector<3x256xf32> to vector<1x256xf32>
    %9 = vector.extract_strided_slice %3 {offsets = [2, 0], sizes = [1, 256], strides = [1, 1]} : vector<3x256xf32> to vector<1x256xf32>
    %cst = arith.constant 1.000000e+00 : f32
    %10 = vector.broadcast %cst : f32 to vector<1x256xf32>
    %11 = tpu.concatenate %10, %5, %7, %9 in 0 : vector<1x256xf32>, vector<1x256xf32>, vector<1x256xf32>, vector<1x256xf32> -> vector<4x256xf32>
    %c0_2 = arith.constant 0 : index
    %c0_3 = arith.constant 0 : index
    %12 = vector.load %arg5[%c0_2, %c0_3] : memref<16x256xf32, #tpu.memory_space<vmem>>, vector<4x256xf32>
    tpu.vector_store %arg5[%c0_2, %c0_3], %11 {strides = array<i32>} : memref<16x256xf32, #tpu.memory_space<vmem>>, vector<4x256xf32>,
    %13 = vector.broadcast %4 : vector<1x256xf32> to vector<4x256xf32>
    %14 = arith.mulf %13, %11 : vector<4x256xf32>
    %c4 = arith.constant 4 : index
    %c0_4 = arith.constant 0 : index
    %15 = vector.load %arg5[%c4, %c0_4] : memref<16x256xf32, #tpu.memory_space<vmem>>, vector<4x256xf32>
    tpu.vector_store %arg5[%c4, %c0_4], %14 {strides = array<i32>} : memref<16x256xf32, #tpu.memory_space<vmem>>, vector<4x256xf32>,
    %16 = vector.broadcast %6 : vector<1x256xf32> to vector<4x256xf32>
    %17 = arith.mulf %16, %11 : vector<4x256xf32>
    %c8 = arith.constant 8 : index
    %c0_5 = arith.constant 0 : index
    %18 = vector.load %arg5[%c8, %c0_5] : memref<16x256xf32, #tpu.memory_space<vmem>>, vector<4x256xf32>
    tpu.vector_store %arg5[%c8, %c0_5], %17 {strides = array<i32>} : memref<16x256xf32, #tpu.memory_space<vmem>>, vector<4x256xf32>,
    %19 = vector.broadcast %8 : vector<1x256xf32> to vector<4x256xf32>
    %20 = arith.mulf %19, %11 : vector<4x256xf32>
    %c12 = arith.constant 12 : index
    %c0_6 = arith.constant 0 : index
    %21 = vector.load %arg5[%c12, %c0_6] : memref<16x256xf32, #tpu.memory_space<vmem>>, vector<4x256xf32>
    tpu.vector_store %arg5[%c12, %c0_6], %20 {strides = array<i32>} : memref<16x256xf32, #tpu.memory_space<vmem>>, vector<4x256xf32>,
    %c0_7 = arith.constant 0 : index
    %c0_8 = arith.constant 0 : index
    %c0_9 = arith.constant 0 : index
    %22 = vector.load %arg3[%c0_7, %c0_8, %c0_9] : memref<1x32x16xf32, #tpu.memory_space<vmem>>, vector<1x32x16xf32>
    %23 = vector.shape_cast %22 : vector<1x32x16xf32> to vector<32x16xf32>
    %c0_10 = arith.constant 0 : index
    %c0_11 = arith.constant 0 : index
    %24 = vector.load %arg5[%c0_10, %c0_11] : memref<16x256xf32, #tpu.memory_space<vmem>>, vector<16x256xf32>
    %cst_12 = arith.constant dense<0.000000e+00> : vector<32x256xf32>
    %25 = tpu.matmul %23, %24, %cst_12 {dimension_numbers = #tpu.dot_dimension_numbers<[1], [0], [0], [1], [0, 0, 1, 1], [], []>} : vector<32x16xf32>, vector<16x256xf32>, vector<32x256xf32> -> vector<32x256xf32>
    %26 = vector.extract_strided_slice %1 {offsets = [0, 0], sizes = [1, 256], strides = [1, 1]} : vector<3x256xf32> to vector<1x256xf32>
    %27 = vector.extract_strided_slice %2 {offsets = [0, 0], sizes = [1, 256], strides = [1, 1]} : vector<3x256xf32> to vector<1x256xf32>
    %28 = vector.extract_strided_slice %3 {offsets = [0, 0], sizes = [1, 256], strides = [1, 1]} : vector<3x256xf32> to vector<1x256xf32>
    %29 = vector.extract_strided_slice %25 {offsets = [0, 0], sizes = [3, 256], strides = [1, 1]} : vector<32x256xf32> to vector<3x256xf32>
    %30 = vector.extract_strided_slice %25 {offsets = [8, 0], sizes = [3, 256], strides = [1, 1]} : vector<32x256xf32> to vector<3x256xf32>
    %31 = vector.broadcast %26 : vector<1x256xf32> to vector<3x256xf32>
    %32 = arith.mulf %31, %30 : vector<3x256xf32>
    %33 = arith.addf %29, %32 : vector<3x256xf32>
    %34 = vector.extract_strided_slice %25 {offsets = [16, 0], sizes = [3, 256], strides = [1, 1]} : vector<32x256xf32> to vector<3x256xf32>
    %35 = vector.broadcast %27 : vector<1x256xf32> to vector<3x256xf32>
    %36 = arith.mulf %35, %34 : vector<3x256xf32>
    %37 = arith.addf %33, %36 : vector<3x256xf32>
    %38 = vector.extract_strided_slice %25 {offsets = [24, 0], sizes = [3, 256], strides = [1, 1]} : vector<32x256xf32> to vector<3x256xf32>
    %39 = vector.broadcast %28 : vector<1x256xf32> to vector<3x256xf32>
    %40 = arith.mulf %39, %38 : vector<3x256xf32>
    %41 = arith.addf %37, %40 : vector<3x256xf32>
    %c0_13 = arith.constant 0 : index
    %c0_14 = arith.constant 0 : index
    %c0_15 = arith.constant 0 : index
    %42 = vector.load %arg4[%c0_13, %c0_14, %c0_15] : memref<1x3x256xf32, #tpu.memory_space<vmem>>, vector<1x3x256xf32>
    %43 = vector.shape_cast %42 : vector<1x3x256xf32> to vector<3x256xf32>
    %44 = vector.shape_cast %41 : vector<3x256xf32> to vector<1x3x256xf32>
    tpu.vector_store %arg4[%c0_13, %c0_14, %c0_15], %44 {strides = array<i32>} : memref<1x3x256xf32, #tpu.memory_space<vmem>>, vector<1x3x256xf32>,
    return
  }
  func.func @transform_0(%arg0: i32, %arg1: i32) -> (i32, i32, i32) {
    %c0_i32 = arith.constant 0 : i32
    %c0_i32_0 = arith.constant 0 : i32
    return %arg0, %c0_i32, %arg1 : i32, i32, i32
  }
  func.func @transform_1(%arg0: i32, %arg1: i32) -> (i32, i32, i32) {
    %c0_i32 = arith.constant 0 : i32
    %c0_i32_0 = arith.constant 0 : i32
    %c0_i32_1 = arith.constant 0 : i32
    return %arg0, %c0_i32, %c0_i32_0 : i32, i32, i32
  }
  func.func @transform_2(%arg0: i32, %arg1: i32) -> (i32, i32, i32) {
    %c0_i32 = arith.constant 0 : i32
    %c0_i32_0 = arith.constant 0 : i32
    return %arg0, %c0_i32, %arg1 : i32, i32, i32
  }
}

</mosaic_0001>

<llo_original>
// kernel: tpu_custom_call.1
$region0: #{tpu_custom_call.1}
  #allocation0 [shape = 'u32[]', space=smem, size = 0x4, offset = 0x4, fixed_abs, tag = 'smem constant byte address 0x4 - core index']
  #allocation1 [shape = 'u32[72,128]{1,0:T(1,128)}', space=vmem, size = 0x9000, scoped, tag = 'internal scratch']
  #allocation2 [shape = 'f32[16,256]{1,0:T(8,128)}', space=vmem, size = 0x4000, scoped, tag = 'scratch operand']
  %s0 = inlined_call_operand.vmem [shape: f32[2,3,256], index: 0, kind: input, shape index: {}]
  %s1 = inlined_call_operand.vmem [shape: f32[2,32,16], index: 1, kind: input, shape index: {}]
  %s2 = inlined_call_operand.vmem [shape: f32[2,3,256], index: 2, kind: output, shape index: {}]
  %s3 = sld [smem:[#allocation0]]
  $region41: #{tpu_custom_call.1} parent=0
    _
  %s5 = ssub.s32 1, %s3
  %s6 = scalar_select 0, %s5, %s3
  loop: start=0, step=1, limit=4
  $region2: #{tpu_custom_call.1} parent=0 // loop_pre_header
    _
  $region3: #{tpu_custom_call.1} parent=0 // loop_header
    %s8 = sphi 0, %s12
    %p9 = scmp.ge.s32.totalorder %s8, 4
    %s15 = sphi 0, %s27
    %s16 = sphi 0, %s23
    %s17 = sphi 0, %s15
    %s18 = sphi 0, %s16
    %s19 = sphi 0, %s17
    %s20 = sphi 0, %s18
    %s32 = sphi 0, %s34
    %s35 = sphi 0, %s32
    %s36 = sphi 0, %s35
    %s52 = sphi 0, %s36
    %s58 = sphi 0, %s60
    %s61 = sphi 0, %s58
    %s62 = sphi 0, %s61
    %s78 = sphi 0, %s62
    %s86 = sphi 0, %s88
    %s89 = sphi 0, %s86
    %s90 = sphi 0, %s89
    %s106 = sphi 0, %s90
  $region4: #{tpu_custom_call.1} parent=0 // loop_header_branch
    %11 = sbr.rel (%p9) target = $region8
  $region5: #{tpu_custom_call.1} parent=0 // loop_body
    %s13 = ssub.s32 %s8, 1
    %s14 = ssub.s32 %s8, 2
    %s21 = sadd.s32 1, %s16
    %p22 = scmp.ge.s32.totalorder %s21, 1
    %s23 = scalar_select %p22, 0, %s21
    %s24 = sadd.s32 1, %s15
    %s25 = scalar_select %p22, %s24, %s15
    %p26 = scmp.ge.s32.totalorder %s25, 2
    %s27 = scalar_select %p26, 0, %s25
    %s28 = ssub.s32 %s15, %s27
    %s29 = ssub.s32 %s16, %s23
    %s30 = sor.u32 %s28, %s29
    %p31 = scmp.eq.s32.totalorder %s30, 0
    %s33 = sadd.s32 %s32, 1
    %s34 = scalar_select %p31, %s32, %s33
    %p37 = pneg %p31
    %p38 = scmp.eq.s32.totalorder %s8, 1
    %p39 = por %p37, %p38
    %p40 = scmp.ne.s32.totalorder %s32, %s35
    %p41 = scmp.eq.s32.totalorder %s8, 0
    %p42 = por %p40, %p41
    %p43 = scmp.ne.s32.totalorder %s32, %s35
    %p44 = scmp.eq.s32.totalorder %s13, 1
    %p45 = por %p43, %p44
    %p46 = scmp.ne.s32.totalorder %s35, %s36
    %p47 = scmp.eq.s32.totalorder %s13, 0
    %p48 = por %p46, %p47
    %p49 = scmp.ne.s32.totalorder %s35, %s36
    %p50 = scmp.eq.s32.totalorder %s14, 1
    %p51 = por %p49, %p50
    %p53 = scmp.ne.s32.totalorder %s36, %s52
    %p54 = scmp.eq.s32.totalorder %s14, 0
    %p55 = por %p53, %p54
    %s56 = ssub.s32 %s15, %s27
    %p57 = scmp.eq.s32.totalorder %s56, 0
    %s59 = sadd.s32 %s58, 1
    %s60 = scalar_select %p57, %s58, %s59
    %p63 = pneg %p57
    %p64 = scmp.eq.s32.totalorder %s8, 1
    %p65 = por %p63, %p64
    %p66 = scmp.ne.s32.totalorder %s58, %s61
    %p67 = scmp.eq.s32.totalorder %s8, 0
    %p68 = por %p66, %p67
    %p69 = scmp.ne.s32.totalorder %s58, %s61
    %p70 = scmp.eq.s32.totalorder %s13, 1
    %p71 = por %p69, %p70
    %p72 = scmp.ne.s32.totalorder %s61, %s62
    %p73 = scmp.eq.s32.totalorder %s13, 0
    %p74 = por %p72, %p73
    %p75 = scmp.ne.s32.totalorder %s61, %s62
    %p76 = scmp.eq.s32.totalorder %s14, 1
    %p77 = por %p75, %p76
    %p79 = scmp.ne.s32.totalorder %s62, %s78
    %p80 = scmp.eq.s32.totalorder %s14, 0
    %p81 = por %p79, %p80
    %s82 = ssub.s32 %s15, %s27
    %s83 = ssub.s32 %s16, %s23
    %s84 = sor.u32 %s82, %s83
    %p85 = scmp.eq.s32.totalorder %s84, 0
    %s87 = sadd.s32 %s86, 1
    %s88 = scalar_select %p85, %s86, %s87
    %p91 = pneg %p85
    %p92 = scmp.eq.s32.totalorder %s8, 1
    %p93 = por %p91, %p92
    %p94 = scmp.ne.s32.totalorder %s86, %s89
    %p95 = scmp.eq.s32.totalorder %s8, 0
    %p96 = por %p94, %p95
    %p97 = scmp.ne.s32.totalorder %s86, %s89
    %p98 = scmp.eq.s32.totalorder %s13, 1
    %p99 = por %p97, %p98
    %p100 = scmp.ne.s32.totalorder %s89, %s90
    %p101 = scmp.eq.s32.totalorder %s13, 0
    %p102 = por %p100, %p101
    %p103 = scmp.ne.s32.totalorder %s89, %s90
    %p104 = scmp.eq.s32.totalorder %s14, 1
    %p105 = por %p103, %p104
    %p107 = scmp.ne.s32.totalorder %s90, %s106
    %p108 = scmp.eq.s32.totalorder %s14, 0
    %p109 = por %p107, %p108
    %p110 = scmp.le.s32.totalorder 1, %s8
    %p111 = scmp.lt.s32.totalorder %s8, 3
    %p112 = pnand %p110, %p111
    %p113 = pneg %p112
    // Predicated region
    $region9: #{tpu_custom_call.1} parent=5 // pred_check
      _
    $region10: #{tpu_custom_call.1} parent=5 // pred_check_branch
      %115 = sbr.rel (%p112) target = $region12
    $region11: #{tpu_custom_call.1} parent=5 // pred_region
      %s116 = ssub.s32 %s8, 1
    $region12: #{tpu_custom_call.1} parent=5 // pred_fallthru
      _
    %p117 = scmp.lt.s32.totalorder %s8, 2
    // Predicated region
    $region13: #{tpu_custom_call.1} parent=5 // pred_check
      %p118 = pneg %p117
    $region14: #{tpu_custom_call.1} parent=5 // pred_check_branch
      %120 = sbr.rel (%p118) target = $region16
    $region15: #{tpu_custom_call.1} parent=5 // pred_region
      // Predicated region
      $region17: #{tpu_custom_call.1} parent=15 // pred_check
        %p121 = pneg %p42
      $region18: #{tpu_custom_call.1} parent=15 // pred_check_branch
        %123 = sbr.rel (%p121) target = $region20
      $region19: #{tpu_custom_call.1} parent=15 // pred_region
        %s124 = smul.u32 2, %s16
        %p125 = scmp.lt.s32.totalorder %s15, 1
        %s126 = scalar_select %p125, %s15, 1
        %p127 = scmp.lt.s32.totalorder %s124, 1
        %s128 = scalar_select %p127, %s124, 1
        %s129 = smul.addr %s126, 2
        %s130 = sadd.s32 %s128, %s129
        %s131 = smul.addr %s130, 4
        %s132 = scalar_lea.vmem %s0, %s131
        %s133 = smul.u32 2, %s16
      $region20: #{tpu_custom_call.1} parent=15 // pred_fallthru
        _
      // Predicated region
      $region21: #{tpu_custom_call.1} parent=15 // pred_check
        %p134 = pneg %p68
      $region22: #{tpu_custom_call.1} parent=15 // pred_check_branch
        %136 = sbr.rel (%p134) target = $region24
      $region23: #{tpu_custom_call.1} parent=15 // pred_region
        %p137 = scmp.lt.s32.totalorder %s15, 1
        %s138 = scalar_select %p137, %s15, 1
        %s139 = smul.addr %s138, 4
        %s140 = smul.addr %s139, 8
        %s141 = scalar_lea.vmem %s1, %s140
      $region24: #{tpu_custom_call.1} parent=15 // pred_fallthru
        _
    $region16: #{tpu_custom_call.1} parent=5 // pred_fallthru
      _
    %p142 = scmp.le.s32.totalorder 1, %s8
    %p143 = scmp.lt.s32.totalorder %s8, 3
    %p144 = pnand %p142, %p143
    %p145 = pneg %p144
    // Predicated region
    $region25: #{tpu_custom_call.1} parent=5 // pred_check
      _
    $region26: #{tpu_custom_call.1} parent=5 // pred_check_branch
      %147 = sbr.rel (%p144) target = $region28
    $region27: #{tpu_custom_call.1} parent=5 // pred_region
      %s148 = ssub.s32 %s8, 1
      %s149 = smul.u32 2, %s18
      %p150 = scmp.lt.s32.totalorder %s17, 1
      %s151 = scalar_select %p150, %s17, 1
      %p152 = scmp.lt.s32.totalorder %s149, 1
      %s153 = scalar_select %p152, %s149, 1
      %s154 = smul.addr %s151, 2
      %s155 = sadd.s32 %s153, %s154
      %s156 = smul.addr %s155, 4
      %s157 = scalar_lea.vmem %s0, %s156
      %p158 = pneg %p48
      %p159 = pneg %p45
      %p160 = scmp.lt.s32.totalorder %s17, 1
      %s161 = scalar_select %p160, %s17, 1
      %s162 = smul.addr %s161, 4
      %s163 = smul.addr %s162, 8
      %s164 = scalar_lea.vmem %s1, %s163
      %p165 = pneg %p74
      %p166 = pneg %p71
      %p167 = pneg %p102
      %p168 = pneg %p99
      %s169 = smul.u32 2, %s18
      %p170 = scmp.lt.s32.totalorder %s17, 1
      %s171 = scalar_select %p170, %s17, 1
      %p172 = scmp.lt.s32.totalorder %s169, 1
      %s173 = scalar_select %p172, %s169, 1
      %s174 = smul.addr %s171, 2
      %s175 = sadd.s32 %s173, %s174
      %s176 = smul.addr %s175, 4
      %s177 = scalar_lea.vmem %s2, %s176
      %s178 = smul.u32 2, %s18
      %p179 = scmp.lt.s32.totalorder %s17, 1
      %s180 = scalar_select %p179, %s17, 1
      %p181 = scmp.lt.s32.totalorder %s178, 1
      %s182 = scalar_select %p181, %s178, 1
      %s183 = smul.addr %s180, 2
      %s184 = sadd.s32 %s182, %s183
      %s185 = smul.addr %s184, 4
      %s186 = scalar_lea.vmem %s0, %s185
      %s187 = smul.u32 2, %s18
      %p188 = scmp.lt.s32.totalorder %s17, 1
      %s189 = scalar_select %p188, %s17, 1
      %s190 = smul.addr %s189, 4
      %s191 = smul.addr %s190, 8
      %s192 = scalar_lea.vmem %s1, %s191
      %s193 = smul.u32 2, %s18
      %p194 = scmp.lt.s32.totalorder %s17, 1
      %s195 = scalar_select %p194, %s17, 1
      %p196 = scmp.lt.s32.totalorder %s193, 1
      %s197 = scalar_select %p196, %s193, 1
      %s198 = smul.addr %s195, 2
      %s199 = sadd.s32 %s197, %s198
      %s200 = smul.addr %s199, 4
      %s201 = scalar_lea.vmem %s2, %s200
      %s202 = smul.u32 2, %s18
      %v203 = vld [vmem:[%s186] sm:$0x77]
      %v204 = vmul.f32 %v203, %v203
      %v205 = vmul.f32 %v204, %v203
      %v207 = vperm.slane %v203, 2
      %v208 = vperm.slane %v203, 6
      %v212 = vperm.slane %v204, 2
      %v213 = vperm.slane %v204, 6
      %v217 = vperm.slane %v205, 2
      %v218 = vperm.slane %v205, 6
      %vm221 = vcmask 1040384
      %v222 = vsel %vm221, 1.0, %v207
      %v223 = vsel %vm221, 1.0, %v208
      %vm224 = vcmask 1041408
      %v225 = vsel %vm224, %v222, %v212
      %v226 = vsel %vm224, %v223, %v213
      %vm227 = vcmask 1042432
      %v228 = vsel %vm227, %v225, %v217
      %v229 = vsel %vm227, %v226, %v218
      %230 = vst [vmem:[#allocation2] sm:$0xf] %v228
      %231 = vst [vmem:[#allocation2 + $0x8] sm:$0xf] %v229
      %v232 = vperm.slane %v203, 1
      %v233 = vperm.slane %v203, 5
      %v236 = vperm.slane %v232, 1
      %v237 = vperm.slane %v233, 1
      %v238 = vmul.f32 %v236, %v228
      %v239 = vmul.f32 %v237, %v229
      %v242 = vrot.slane %v238, 4
      %v243 = vrot.slane %v239, 4
      %246 = vst [vmem:[#allocation2] sm:$0xf0] %v242
      %247 = vst [vmem:[#allocation2 + $0x8] sm:$0xf0] %v243
      %v248 = vperm.slane %v204, 1
      %v249 = vperm.slane %v204, 5
      %v252 = vperm.slane %v248, 1
      %v253 = vperm.slane %v249, 1
      %v254 = vmul.f32 %v252, %v228
      %v255 = vmul.f32 %v253, %v229
      %256 = vst [vmem:[#allocation2 + $0x10] sm:$0xf] %v254
      %257 = vst [vmem:[#allocation2 + $0x18] sm:$0xf] %v255
      %v258 = vperm.slane %v205, 1
      %v259 = vperm.slane %v205, 5
      %v262 = vperm.slane %v258, 1
      %v263 = vperm.slane %v259, 1
      %v264 = vmul.f32 %v262, %v228
      %v265 = vmul.f32 %v263, %v229
      %v268 = vrot.slane %v264, 4
      %v269 = vrot.slane %v265, 4
      %272 = vst [vmem:[#allocation2 + $0x10] sm:$0xf0] %v268
      %273 = vst [vmem:[#allocation2 + $0x18] sm:$0xf0] %v269
      %v274 = vld [vmem:[%s192] sm:$0xff]
      %v275 = vld [vmem:[%s192 + $0x8] sm:$0xff]
      %v276 = vld [vmem:[%s192 + $0x10] sm:$0xff]
      %v277 = vld [vmem:[%s192 + $0x18] sm:$0xff]
      %v278 = vld [vmem:[#allocation2] sm:$0xff]
      %v279 = vld [vmem:[#allocation2 + $0x8] sm:$0xff]
      %v280 = vld [vmem:[#allocation2 + $0x10] sm:$0xff]
      %v281 = vld [vmem:[#allocation2 + $0x18] sm:$0xff]
      %vm282 = vcmask 130048
      %v284 = vsel %vm282, %v274, 0
      %v287 = vsel %vm282, %v275, 0
      %v290 = vsel %vm282, %v276, 0
      %v293 = vsel %vm282, %v277, 0
      %295 = vmatpush.msra.mxu0 0.0
      %296 = vmatpush.msra.mxu0 0.0
      %297 = vmatpush.msra.mxu0 0.0
      %298 = vmatpush.msra.mxu0 0.0
      %299 = vmatpush.msra.mxu0 0.0
      %300 = vmatpush.msra.mxu0 0.0
      %301 = vmatpush.msra.mxu0 0.0
      %302 = vmatpush.msra.mxu0 0.0
      %303 = vmatpush.msra.mxu0 0.0
      %304 = vmatpush.msra.mxu0 0.0
      %305 = vmatpush.msra.mxu0 0.0
      %306 = vmatpush.msra.mxu0 0.0
      %307 = vmatpush.msra.mxu0 0.0
      %308 = vmatpush.msra.mxu0 0.0
      %309 = vmatpush.msra.mxu0 %v280
      %310 = vmatpush.msra.mxu0 %v278
      %311 = vmatmul.f32.gmra.mxu0 %v284
      %v312 = vpop.f32.mrf.mxu0
      %v313 = vadd.f32 0.0, %v312
      %314 = vmatmul.f32.gmra.mxu0 %v287
      %v315 = vpop.f32.mrf.mxu0
      %v316 = vadd.f32 0.0, %v315
      %317 = vmatmul.f32.gmra.mxu0 %v290
      %v318 = vpop.f32.mrf.mxu0
      %v319 = vadd.f32 0.0, %v318
      %320 = vmatmul.f32.gmra.mxu0 %v293
      %v321 = vpop.f32.mrf.mxu0
      %v322 = vadd.f32 0.0, %v321
      %323 = vdwg.mxu0
      %324 = vmatpush.msra.mxu0 0.0
      %325 = vmatpush.msra.mxu0 0.0
      %326 = vmatpush.msra.mxu0 0.0
      %327 = vmatpush.msra.mxu0 0.0
      %328 = vmatpush.msra.mxu0 0.0
      %329 = vmatpush.msra.mxu0 0.0
      %330 = vmatpush.msra.mxu0 0.0
      %331 = vmatpush.msra.mxu0 0.0
      %332 = vmatpush.msra.mxu0 0.0
      %333 = vmatpush.msra.mxu0 0.0
      %334 = vmatpush.msra.mxu0 0.0
      %335 = vmatpush.msra.mxu0 0.0
      %336 = vmatpush.msra.mxu0 0.0
      %337 = vmatpush.msra.mxu0 0.0
      %338 = vmatpush.msra.mxu0 %v281
      %339 = vmatpush.msra.mxu0 %v279
      %340 = vmatmul.f32.gmra.mxu0 %v284
      %v341 = vpop.f32.mrf.mxu0
      %v342 = vadd.f32 0.0, %v341
      %343 = vmatmul.f32.gmra.mxu0 %v287
      %v344 = vpop.f32.mrf.mxu0
      %v345 = vadd.f32 0.0, %v344
      %346 = vmatmul.f32.gmra.mxu0 %v290
      %v347 = vpop.f32.mrf.mxu0
      %v348 = vadd.f32 0.0, %v347
      %349 = vmatmul.f32.gmra.mxu0 %v293
      %v350 = vpop.f32.mrf.mxu0
      %v351 = vadd.f32 0.0, %v350
      %352 = vdwg.mxu0
      %v353 = vperm.slane %v203, 0
      %v354 = vperm.slane %v203, 4
      %v357 = vperm.slane %v353, 0
      %v358 = vperm.slane %v354, 0
      %v359 = vmul.f32 %v357, %v316
      %v360 = vmul.f32 %v358, %v345
      %v361 = vadd.f32 %v313, %v359
      %v362 = vadd.f32 %v342, %v360
      %v363 = vperm.slane %v204, 0
      %v364 = vperm.slane %v204, 4
      %v367 = vperm.slane %v363, 0
      %v368 = vperm.slane %v364, 0
      %v369 = vmul.f32 %v367, %v319
      %v370 = vmul.f32 %v368, %v348
      %v371 = vadd.f32 %v361, %v369
      %v372 = vadd.f32 %v362, %v370
      %v373 = vperm.slane %v205, 0
      %v374 = vperm.slane %v205, 4
      %v377 = vperm.slane %v373, 0
      %v378 = vperm.slane %v374, 0
      %v379 = vmul.f32 %v377, %v322
      %v380 = vmul.f32 %v378, %v351
      %v381 = vadd.f32 %v371, %v379
      %v382 = vadd.f32 %v372, %v380
      %v385 = vrot.slane %v382, 4
      %vm386 = vcmask 1043456
      %v387 = vsel %vm386, %v381, %v385
      %389 = vst [vmem:[%s201] sm:$0x77] %v387
      %s390 = smul.u32 2, %s18
      %p391 = scmp.lt.s32.totalorder %s17, 1
      %s392 = scalar_select %p391, %s17, 1
      %p393 = scmp.lt.s32.totalorder %s390, 1
      %s394 = scalar_select %p393, %s390, 1
      %s395 = smul.addr %s392, 2
      %s396 = sadd.s32 %s394, %s395
      %s397 = smul.addr %s396, 4
      %s398 = scalar_lea.vmem %s2, %s397
      // Predicated region
      $region29: #{tpu_custom_call.1} parent=27 // pred_check
        %p399 = pneg %p99
      $region30: #{tpu_custom_call.1} parent=27 // pred_check_branch
        %401 = sbr.rel (%p399) target = $region32
      $region31: #{tpu_custom_call.1} parent=27 // pred_region
        %s402 = smul.u32 2, %s18
      $region32: #{tpu_custom_call.1} parent=27 // pred_fallthru
        _
    $region28: #{tpu_custom_call.1} parent=5 // pred_fallthru
      _
    %p403 = scmp.le.s32.totalorder 2, %s8
    // Predicated region
    $region33: #{tpu_custom_call.1} parent=5 // pred_check
      %p404 = pneg %p403
    $region34: #{tpu_custom_call.1} parent=5 // pred_check_branch
      %406 = sbr.rel (%p404) target = $region36
    $region35: #{tpu_custom_call.1} parent=5 // pred_region
      %s407 = ssub.s32 %s8, 2
      // Predicated region
      $region37: #{tpu_custom_call.1} parent=35 // pred_check
        %p408 = pneg %p105
      $region38: #{tpu_custom_call.1} parent=35 // pred_check_branch
        %410 = sbr.rel (%p408) target = $region40
      $region39: #{tpu_custom_call.1} parent=35 // pred_region
        %s411 = smul.u32 2, %s20
        %p412 = scmp.lt.s32.totalorder %s19, 1
        %s413 = scalar_select %p412, %s19, 1
        %p414 = scmp.lt.s32.totalorder %s411, 1
        %s415 = scalar_select %p414, %s411, 1
        %s416 = smul.addr %s413, 2
        %s417 = sadd.s32 %s415, %s416
        %s418 = smul.addr %s417, 4
        %s419 = scalar_lea.vmem %s2, %s418
      $region40: #{tpu_custom_call.1} parent=35 // pred_fallthru
        _
    $region36: #{tpu_custom_call.1} parent=5 // pred_fallthru
      _
  $region6: #{tpu_custom_call.1} parent=0 // loop_footer
    %s12 = sadd.s32 1, %s8
  $region7: #{tpu_custom_call.1} parent=0 // loop_footer_branch
    %7 = sbr.rel target = $region3
  $region8: #{tpu_custom_call.1} parent=0 // loop_exit
    _

</llo_original>
